<compile_context>
chip_gen: v7x
topology: tpu7x:2x2x1
jax: 0.10.0
libtpu: 0.0.40
codegen_flags: <defaults>
</compile_context>

<pallas_src>
import functools
import math

import jax
import jax.numpy as jnp
from jax.experimental import pallas as pl
from jax.experimental.pallas import tpu as pltpu


# ----------------------------- helpers ---------------------------------------


def _round_up(x, m):
    return (x + m - 1) // m * m


def _pad2(a, rows, cols):
    pr, pc = rows - a.shape[0], cols - a.shape[1]
    if pr or pc:
        a = jnp.pad(a, ((0, pr), (0, pc)))
    return a


def _sublane_multiple(compute_dtype, fallback_dtype):
    dt = jnp.dtype(compute_dtype if compute_dtype is not None else fallback_dtype)
    return {4: 8, 2: 16, 1: 32}.get(dt.itemsize, 8)


def _tiling(batch, n_in, n_out, tb, tn, tk, sub):
    """Clamp tiles to the padded problem and pad dims to tile multiples."""
    tb = min(tb, _round_up(batch, sub))
    tk = min(tk, _round_up(n_in, 128))
    tn = min(tn, _round_up(n_out, 128))
    pb = _round_up(batch, tb)
    pk = _round_up(n_in, tk)
    pn = _round_up(n_out, tn)
    # v7x has 2 TensorCores sharded over the "parallel" grid axes: make sure the
    # (i, j) grid has >= 2 steps when the output is wide enough to split.
    if pb // tb == 1 and pn // tn == 1 and tn >= 256:
        tn //= 2
    return pb, pk, pn, tb, tk, tn


def _compiler_params(vmem_bytes_est):
    # Generation-safe scoped-VMEM cap: 40 MiB leaves headroom even on v7x
    # (64 MiB physical per TensorCore).
    cap = 40 * 1024 * 1024
    if vmem_bytes_est > cap:
        raise ValueError(
            f"tile config needs ~{vmem_bytes_est} bytes of VMEM (> {cap}); "
            "reduce tb/tn/tk")
    vmem_limit = min(max(int(1.5 * vmem_bytes_est), 32 * 1024 * 1024), cap)
    return pltpu.CompilerParams(
        dimension_semantics=("parallel", "parallel", "arbitrary"),
        vmem_limit_bytes=vmem_limit,
    )


def _specs(tb, tn, tk):
    x_spec = pl.BlockSpec((tb, tk), lambda i, j, k: (i, k))
    w_spec = pl.BlockSpec((tn, tk), lambda i, j, k: (j, k))   # native (n_out, n_in)
    b_spec = pl.BlockSpec((1, tn), lambda i, j, k: (0, j))
    o_spec = pl.BlockSpec((tb, tn), lambda i, j, k: (i, j))
    return x_spec, w_spec, b_spec, o_spec


def _mxu(a, b, compute_dtype):
    """(tb, tk) x (tn, tk) -> (tb, tn): contracts the RHS minor dim (no transpose)."""
    if compute_dtype is not None:
        a = a.astype(compute_dtype)
        b = b.astype(compute_dtype)
    return jax.lax.dot_general(
        a, b, dimension_numbers=(((1,), (1,)), ((), ())),
        preferred_element_type=jnp.float32)


# ----------------------------- kernels ---------------------------------------


def _linear_kernel(x_ref, w_ref, b_ref, o_ref, acc_ref, *, out_offset, compute_dtype):
    """out = x @ w.T + b (+ out_offset); grid = (batch, n_out, k), k reduced."""
    k = pl.program_id(2)

    @pl.when(k == 0)
    def _():
        acc_ref[...] = (jnp.zeros(acc_ref.shape, jnp.float32)
                        + b_ref[...].astype(jnp.float32) + out_offset)

    acc_ref[...] += _mxu(x_ref[...], w_ref[...], compute_dtype)

    @pl.when(k == pl.num_programs(2) - 1)
    def _():
        o_ref[...] = acc_ref[...].astype(o_ref.dtype)


def _sampled_kernel(x_ref, muw_ref, ls2_ref, rnd_ref, b_ref, o_ref, acc_ref,
                    *, out_offset, compute_dtype):
    """Sampled weight built per tile in-kernel (exp/sqrt land in the EUP slot):
       w = mu_w + sqrt(exp(logsig2)) * random ; out = x @ w.T + b + out_offset."""
    k = pl.program_id(2)

    @pl.when(k == 0)
    def _():
        acc_ref[...] = (jnp.zeros(acc_ref.shape, jnp.float32)
                        + b_ref[...].astype(jnp.float32) + out_offset)

    w = (muw_ref[...].astype(jnp.float32)
         + jnp.sqrt(jnp.exp(ls2_ref[...].astype(jnp.float32)))
         * rnd_ref[...].astype(jnp.float32))
    acc_ref[...] += _mxu(x_ref[...], w, compute_dtype)

    @pl.when(k == pl.num_programs(2) - 1)
    def _():
        o_ref[...] = acc_ref[...].astype(o_ref.dtype)


def _train_kernel(x_ref, muw_ref, sw_ref, b_ref, eps_ref, o_ref,
                  mu_acc_ref, var_acc_ref, *, exp_in_kernel, compute_dtype):
    """Local reparameterization: out = (x@mu_w.T + b) + sqrt(x^2 @ s2_w.T + 1e-8) * eps.
    exp(logsig2_w) is done per tile in-kernel unless hoisted (sw = exp already)."""
    k = pl.program_id(2)

    @pl.when(k == 0)
    def _():
        mu_acc_ref[...] = (jnp.zeros(mu_acc_ref.shape, jnp.float32)
                           + b_ref[...].astype(jnp.float32))
        var_acc_ref[...] = jnp.zeros_like(var_acc_ref)

    x = x_ref[...]
    mu_acc_ref[...] += _mxu(x, muw_ref[...], compute_dtype)

    # Variance path stays in f32 (exp(logsig2) ~ 1e-4 is precision sensitive).
    xf = x.astype(jnp.float32)
    s2 = sw_ref[...].astype(jnp.float32)
    if exp_in_kernel:
        s2 = jnp.exp(s2)
    var_acc_ref[...] += jax.lax.dot_general(
        xf * xf, s2, dimension_numbers=(((1,), (1,)), ((), ())),
        preferred_element_type=jnp.float32)

    @pl.when(k == pl.num_programs(2) - 1)
    def _():
        o_ref[...] = (mu_acc_ref[...]
                      + jnp.sqrt(var_acc_ref[...] + 1e-8)
                      * eps_ref[...].astype(jnp.float32)).astype(o_ref.dtype)


# ----------------------------- pallas_call wrappers ---------------------------


def _run_linear(x, w, bias, out_offset, *, tb, tn, tk, compute_dtype):
    batch, n_in = x.shape
    n_out = w.shape[0]
    sub = _sublane_multiple(compute_dtype, x.dtype)
    pb, pk, pn, tb, tk, tn = _tiling(batch, n_in, n_out, tb, tn, tk, sub)

    xp = _pad2(x, pb, pk)
    wp = _pad2(w, pn, pk)
    bp = _pad2(bias.reshape(1, -1).astype(jnp.float32), 1, pn)

    nb, nn, nk = pb // tb, pn // tn, pk // tk
    x_spec, w_spec, b_spec, o_spec = _specs(tb, tn, tk)

    xsz, wsz, osz = xp.dtype.itemsize, wp.dtype.itemsize, jnp.dtype(x.dtype).itemsize
    vmem_est = (2 * (xsz * tb * tk + wsz * tn * tk + 4 * tn + osz * tb * tn)
                + 4 * tb * tn)
    cost = pl.CostEstimate(
        flops=2 * pb * pk * pn,
        transcendentals=0,
        bytes_accessed=(xsz * pb * pk * nn + wsz * pk * pn * nb
                        + osz * pb * pn + 4 * pn * nb),
    )

    out = pl.pallas_call(
        functools.partial(_linear_kernel, out_offset=out_offset,
                          compute_dtype=compute_dtype),
        out_shape=jax.ShapeDtypeStruct((pb, pn), x.dtype),
        grid_spec=pltpu.PrefetchScalarGridSpec(
            num_scalar_prefetch=0,
            grid=(nb, nn, nk),
            in_specs=[x_spec, w_spec, b_spec],
            out_specs=o_spec,
            scratch_shapes=[pltpu.VMEM((tb, tn), jnp.float32)],
        ),
        compiler_params=_compiler_params(vmem_est),
        cost_estimate=cost,
    )(xp, wp, bp)
    return out[:batch, :n_out]


def _run_sampled_fused(x, mu_w, logsig2_w, random_state, bias, out_offset, *,
                       tb, tn, tk, compute_dtype):
    batch, n_in = x.shape
    n_out = mu_w.shape[0]
    sub = _sublane_multiple(compute_dtype, x.dtype)
    pb, pk, pn, tb, tk, tn = _tiling(batch, n_in, n_out, tb, tn, tk, sub)

    xp = _pad2(x, pb, pk)
    muwp = _pad2(mu_w, pn, pk)
    ls2p = _pad2(logsig2_w, pn, pk)
    rndp = _pad2(random_state, pn, pk)
    bp = _pad2(bias.reshape(1, -1).astype(jnp.float32), 1, pn)

    nb, nn, nk = pb // tb, pn // tn, pk // tk
    x_spec, w_spec, b_spec, o_spec = _specs(tb, tn, tk)

    xsz, wsz, osz = xp.dtype.itemsize, muwp.dtype.itemsize, jnp.dtype(x.dtype).itemsize
    vmem_est = (2 * (xsz * tb * tk + 3 * wsz * tn * tk + 4 * tn + osz * tb * tn)
                + 4 * tb * tn)
    cost = pl.CostEstimate(
        flops=2 * pb * pk * pn + 3 * pn * pk * nb,
        transcendentals=2 * pn * pk * nb,
        bytes_accessed=(xsz * pb * pk * nn + 3 * wsz * pk * pn * nb
                        + osz * pb * pn + 4 * pn * nb),
    )

    out = pl.pallas_call(
        functools.partial(_sampled_kernel, out_offset=out_offset,
                          compute_dtype=compute_dtype),
        out_shape=jax.ShapeDtypeStruct((pb, pn), x.dtype),
        grid_spec=pltpu.PrefetchScalarGridSpec(
            num_scalar_prefetch=0,
            grid=(nb, nn, nk),
            in_specs=[x_spec, w_spec, w_spec, w_spec, b_spec],
            out_specs=o_spec,
            scratch_shapes=[pltpu.VMEM((tb, tn), jnp.float32)],
        ),
        compiler_params=_compiler_params(vmem_est),
        cost_estimate=cost,
    )(xp, muwp, ls2p, rndp, bp)
    return out[:batch, :n_out]


def _run_train(x, mu_w, sw, bias, eps, *, tb, tn, tk, compute_dtype, exp_in_kernel):
    batch, n_in = x.shape
    n_out = mu_w.shape[0]
    sub = _sublane_multiple(compute_dtype, x.dtype)
    pb, pk, pn, tb, tk, tn = _tiling(batch, n_in, n_out, tb, tn, tk, sub)

    xp = _pad2(x, pb, pk)
    muwp = _pad2(mu_w, pn, pk)
    swp = _pad2(sw, pn, pk)
    bp = _pad2(bias.reshape(1, -1).astype(jnp.float32), 1, pn)
    epsp = _pad2(eps.astype(jnp.float32), pb, pn)

    nb, nn, nk = pb // tb, pn // tn, pk // tk
    x_spec, w_spec, b_spec, o_spec = _specs(tb, tn, tk)
    e_spec = pl.BlockSpec((tb, tn), lambda i, j, k: (i, j))

    xsz, wsz, osz = xp.dtype.itemsize, muwp.dtype.itemsize, jnp.dtype(x.dtype).itemsize
    vmem_est = (2 * (xsz * tb * tk + 2 * wsz * tn * tk + 4 * tn
                     + 4 * tb * tn + osz * tb * tn)
                + 2 * 4 * tb * tn)
    cost = pl.CostEstimate(
        flops=4 * pb * pk * pn,
        transcendentals=(pn * pk * nb if exp_in_kernel else 0) + pb * pn,
        bytes_accessed=(xsz * pb * pk * nn + 2 * wsz * pk * pn * nb
                        + (4 + osz) * pb * pn + 4 * pn * nb),
    )

    out = pl.pallas_call(
        functools.partial(_train_kernel, exp_in_kernel=exp_in_kernel,
                          compute_dtype=compute_dtype),
        out_shape=jax.ShapeDtypeStruct((pb, pn), x.dtype),
        grid_spec=pltpu.PrefetchScalarGridSpec(
            num_scalar_prefetch=0,
            grid=(nb, nn, nk),
            in_specs=[x_spec, w_spec, w_spec, b_spec, e_spec],
            out_specs=o_spec,
            scratch_shapes=[pltpu.VMEM((tb, tn), jnp.float32),
                            pltpu.VMEM((tb, tn), jnp.float32)],
        ),
        compiler_params=_compiler_params(vmem_est),
        cost_estimate=cost,
    )(xp, muwp, swp, bp, epsp)
    return out[:batch, :n_out]


# ----------------------------- public forward modes ---------------------------


def vblinear_train(x, mu_w, logsig2_w, bias, eps, *,
                   tb=512, tn=256, tk=2048, compute_dtype=None):
    batch = x.shape[0]
    sub = _sublane_multiple(compute_dtype, x.dtype)
    tb_eff = min(tb, _round_up(batch, sub))
    nb = pl.cdiv(batch, tb_eff)
    # Hoist exp(logsig2) to one XLA pass only when the weight is re-read across
    # multiple batch tiles; otherwise keep it in-kernel (EUP slot, no HBM cost).
    exp_in_kernel = (nb == 1)
    sw = logsig2_w if exp_in_kernel else jnp.exp(logsig2_w)
    return _run_train(x, mu_w, sw, bias, eps, tb=tb, tn=tn, tk=tk,
                      compute_dtype=compute_dtype, exp_in_kernel=exp_in_kernel)


def vblinear_eval_map(x, mu_w, bias, *,
                      tb=512, tn=256, tk=2048, compute_dtype=None):
    return _run_linear(x, mu_w, bias, 0.0,
                       tb=tb, tn=tn, tk=tk, compute_dtype=compute_dtype)


def vblinear_eval_sampled(x, mu_w, logsig2_w, bias, random_state, *,
                          tb=512, tn=256, tk=2048, compute_dtype=None):
    # Note: the "+ 1e-8" output offset is faithful to the PyTorch reference.
    batch = x.shape[0]
    sub = _sublane_multiple(compute_dtype, x.dtype)
    tb_eff = min(tb, _round_up(batch, sub))
    nb = pl.cdiv(batch, tb_eff)
    if nb == 1:
        # Weight visited exactly once: build the sampled weight per tile in-kernel.
        return _run_sampled_fused(x, mu_w, logsig2_w, random_state, bias, 1e-8,
                                  tb=tb, tn=tn, tk=tk, compute_dtype=compute_dtype)
    # Weight re-read across batch tiles: build it once in XLA, then plain linear.
    w = mu_w + jnp.sqrt(jnp.exp(logsig2_w)) * random_state
    return _run_linear(x, w, bias, 1e-8,
                       tb=tb, tn=tn, tk=tk, compute_dtype=compute_dtype)


# ------------------------- module-equivalent state -----------------------------


def init_vblinear_params(key, in_features, out_features, std_init=-9.0):
    """Deterministic re-implementation of VBLinear.reset_parameters()."""
    k_mu, k_ls = jax.random.split(key)
    stdv = 1.0 / math.sqrt(in_features)
    mu_w = stdv * jax.random.normal(k_mu, (out_features, in_features), jnp.float32)
    logsig2_w = std_init + 0.001 * jax.random.normal(
        k_ls, (out_features, in_features), jnp.float32)
    bias = jnp.zeros((out_features,), jnp.float32)
    return mu_w, logsig2_w, bias


# --------------------------------- main ----------------------------------------


if __name__ == "__main__":
    key = jax.random.PRNGKey(0)
    k_param, k_x, k_eps, k_rnd = jax.random.split(key, 4)

    batch, n_in, n_out = 16, 32, 32
    mu_w, logsig2_w, bias = init_vblinear_params(k_param, n_in, n_out)

    x = jax.random.normal(k_x, (batch, n_in), jnp.float32)
    eps = jax.random.normal(k_eps, (batch, n_out), jnp.float32)          # randn_like(mu_out)
    random_state = jax.random.normal(k_rnd, (n_out, n_in), jnp.float32)  # self.random

    # references
    ref_mu = x @ mu_w.T + bias
    ref_var = (x * x) @ jnp.exp(logsig2_w).T + 1e-8
    ref_train = ref_mu + jnp.sqrt(ref_var) * eps
    w_samp = mu_w + jnp.sqrt(jnp.exp(logsig2_w)) * random_state
    ref_samp = x @ w_samp.T + bias + 1e-8

    # --- training mode (single batch tile -> exp(logsig2) in-kernel) ---
    out_train = jax.block_until_ready(vblinear_train(x, mu_w, logsig2_w, bias, eps))
    assert out_train.shape == (batch, n_out)
    assert jnp.allclose(out_train, ref_train, atol=1e-5, rtol=1e-5)

    # --- training mode (multiple batch tiles -> exp hoisted to one XLA pass) ---
    out_train2 = jax.block_until_ready(
        vblinear_train(x, mu_w, logsig2_w, bias, eps, tb=8))
    assert jnp.allclose(out_train2, ref_train, atol=1e-5, rtol=1e-5)

    # --- eval, MAP mode ---
    out_map = jax.block_until_ready(vblinear_eval_map(x, mu_w, bias))
    assert jnp.allclose(out_map, ref_mu, atol=1e-5, rtol=1e-5)

    # --- eval, sampled-weight mode (fused in-kernel weight construction) ---
    out_samp = jax.block_until_ready(
        vblinear_eval_sampled(x, mu_w, logsig2_w, bias, random_state))
    assert jnp.allclose(out_samp, ref_samp, atol=1e-5, rtol=1e-5)

    # --- eval, sampled-weight mode (multi batch tile -> weight built once in XLA) ---
    out_samp2 = jax.block_until_ready(
        vblinear_eval_sampled(x, mu_w, logsig2_w, bias, random_state, tb=8))
    assert jnp.allclose(out_samp2, ref_samp, atol=1e-5, rtol=1e-5)

    # --- bf16 matmul operands (cast in-kernel) with f32 accumulation ---
    out_map_bf16 = jax.block_until_ready(
        vblinear_eval_map(x, mu_w, bias, compute_dtype=jnp.bfloat16))
    assert jnp.allclose(out_map_bf16, ref_mu, atol=5e-2, rtol=5e-2)

    # --- ragged batch (tail padded and sliced off) ---
    out_ragged = jax.block_until_ready(vblinear_eval_map(x[:13], mu_w, bias))
    assert jnp.allclose(out_ragged, ref_mu[:13], atol=1e-5, rtol=1e-5)

    print("KERNEL_OK")
</pallas_src>

<mosaic_0001>
module attributes {stable_mosaic.version = 11 : i64} {
  func.func @_train_kernel(%arg0: i32, %arg1: i32, %arg2: i32, %arg3: memref<16x128xf32, #tpu.memory_space<vmem>>, %arg4: memref<128x128xf32, #tpu.memory_space<vmem>>, %arg5: memref<128x128xf32, #tpu.memory_space<vmem>>, %arg6: memref<1x128xf32, #tpu.memory_space<vmem>>, %arg7: memref<16x128xf32, #tpu.memory_space<vmem>>, %arg8: memref<16x128xf32, #tpu.memory_space<vmem>>, %arg9: memref<16x128xf32, #tpu.memory_space<vmem>>, %arg10: memref<16x128xf32, #tpu.memory_space<vmem>>) attributes {dimension_semantics = [#tpu.dimension_semantics<parallel>, #tpu.dimension_semantics<parallel>, #tpu.dimension_semantics<arbitrary>], iteration_bounds = array<i64: 1, 1, 1>, scalar_prefetch = 0 : i64, scratch_operands = 2 : i64, tpu.core_type = #tpu.core_type<tc>, window_params = [{transform_indices = @transform_0, window_bounds = array<i64: 16, 128>}, {transform_indices = @transform_1, window_bounds = array<i64: 128, 128>}, {transform_indices = @transform_2, window_bounds = array<i64: 128, 128>}, {transform_indices = @transform_3, window_bounds = array<i64: 1, 128>}, {transform_indices = @transform_4, window_bounds = array<i64: 16, 128>}, {transform_indices = @transform_5, window_bounds = array<i64: 16, 128>}]} {
    %c0_i32 = arith.constant 0 : i32
    %0 = arith.cmpi eq, %arg2, %c0_i32 : i32
    %1 = arith.extui %0 : i1 to i32
    %c0_i32_0 = arith.constant 0 : i32
    %2 = arith.cmpi ne, %1, %c0_i32_0 : i32
    scf.if %2 {
      %cst_17 = arith.constant 0.000000e+00 : f32
      %19 = vector.broadcast %cst_17 : f32 to vector<16x128xf32>
      %c0_18 = arith.constant 0 : index
      %c0_19 = arith.constant 0 : index
      %20 = vector.load %arg6[%c0_18, %c0_19] : memref<1x128xf32, #tpu.memory_space<vmem>>, vector<1x128xf32>
      %21 = vector.broadcast %20 : vector<1x128xf32> to vector<16x128xf32>
      %22 = arith.addf %19, %21 : vector<16x128xf32>
      %c0_20 = arith.constant 0 : index
      %c0_21 = arith.constant 0 : index
      %23 = vector.load %arg9[%c0_20, %c0_21] : memref<16x128xf32, #tpu.memory_space<vmem>>, vector<16x128xf32>
      tpu.vector_store %arg9[%c0_20, %c0_21], %22 {strides = array<i32>} : memref<16x128xf32, #tpu.memory_space<vmem>>, vector<16x128xf32>,
      %cst_22 = arith.constant 0.000000e+00 : f32
      %24 = vector.broadcast %cst_22 : f32 to vector<16x128xf32>
      %c0_23 = arith.constant 0 : index
      %c0_24 = arith.constant 0 : index
      %25 = vector.load %arg10[%c0_23, %c0_24] : memref<16x128xf32, #tpu.memory_space<vmem>>, vector<16x128xf32>
      tpu.vector_store %arg10[%c0_23, %c0_24], %24 {strides = array<i32>} : memref<16x128xf32, #tpu.memory_space<vmem>>, vector<16x128xf32>,
    } else {
    }
    %c0 = arith.constant 0 : index
    %c0_1 = arith.constant 0 : index
    %3 = vector.load %arg3[%c0, %c0_1] : memref<16x128xf32, #tpu.memory_space<vmem>>, vector<16x128xf32>
    %c0_2 = arith.constant 0 : index
    %c0_3 = arith.constant 0 : index
    %4 = vector.load %arg9[%c0_2, %c0_3] : memref<16x128xf32, #tpu.memory_space<vmem>>, vector<16x128xf32>
    %c0_4 = arith.constant 0 : index
    %c0_5 = arith.constant 0 : index
    %5 = vector.load %arg4[%c0_4, %c0_5] : memref<128x128xf32, #tpu.memory_space<vmem>>, vector<128x128xf32>
    %cst = arith.constant dense<0.000000e+00> : vector<16x128xf32>
    %6 = tpu.matmul %3, %5, %cst {dimension_numbers = #tpu.dot_dimension_numbers<[1], [1], [0], [0], [0, 0, 1, 0], [], []>} : vector<16x128xf32>, vector<128x128xf32>, vector<16x128xf32> -> vector<16x128xf32>
    %7 = arith.addf %4, %6 : vector<16x128xf32>
    %c0_6 = arith.constant 0 : index
    %c0_7 = arith.constant 0 : index
    %8 = vector.load %arg9[%c0_6, %c0_7] : memref<16x128xf32, #tpu.memory_space<vmem>>, vector<16x128xf32>
    tpu.vector_store %arg9[%c0_6, %c0_7], %7 {strides = array<i32>} : memref<16x128xf32, #tpu.memory_space<vmem>>, vector<16x128xf32>,
    %c0_8 = arith.constant 0 : index
    %c0_9 = arith.constant 0 : index
    %9 = vector.load %arg5[%c0_8, %c0_9] : memref<128x128xf32, #tpu.memory_space<vmem>>, vector<128x128xf32>
    %10 = math.exp %9 : vector<128x128xf32>
    %c0_10 = arith.constant 0 : index
    %c0_11 = arith.constant 0 : index
    %11 = vector.load %arg10[%c0_10, %c0_11] : memref<16x128xf32, #tpu.memory_space<vmem>>, vector<16x128xf32>
    %12 = arith.mulf %3, %3 : vector<16x128xf32>
    %cst_12 = arith.constant dense<0.000000e+00> : vector<16x128xf32>
    %13 = tpu.matmul %12, %10, %cst_12 {dimension_numbers = #tpu.dot_dimension_numbers<[1], [1], [0], [0], [0, 0, 1, 0], [], []>} : vector<16x128xf32>, vector<128x128xf32>, vector<16x128xf32> -> vector<16x128xf32>
    %14 = arith.addf %11, %13 : vector<16x128xf32>
    %c0_13 = arith.constant 0 : index
    %c0_14 = arith.constant 0 : index
    %15 = vector.load %arg10[%c0_13, %c0_14] : memref<16x128xf32, #tpu.memory_space<vmem>>, vector<16x128xf32>
    tpu.vector_store %arg10[%c0_13, %c0_14], %14 {strides = array<i32>} : memref<16x128xf32, #tpu.memory_space<vmem>>, vector<16x128xf32>,
    %c0_i32_15 = arith.constant 0 : i32
    %16 = arith.cmpi eq, %arg2, %c0_i32_15 : i32
    %17 = arith.extui %16 : i1 to i32
    %c0_i32_16 = arith.constant 0 : i32
    %18 = arith.cmpi ne, %17, %c0_i32_16 : i32
    scf.if %18 {
      %c0_17 = arith.constant 0 : index
      %c0_18 = arith.constant 0 : index
      %19 = vector.load %arg9[%c0_17, %c0_18] : memref<16x128xf32, #tpu.memory_space<vmem>>, vector<16x128xf32>
      %c0_19 = arith.constant 0 : index
      %c0_20 = arith.constant 0 : index
      %20 = vector.load %arg10[%c0_19, %c0_20] : memref<16x128xf32, #tpu.memory_space<vmem>>, vector<16x128xf32>
      %cst_21 = arith.constant 9.99999993E-9 : f32
      %21 = vector.broadcast %cst_21 : f32 to vector<16x128xf32>
      %22 = arith.addf %20, %21 : vector<16x128xf32>
      %23 = math.sqrt %22 : vector<16x128xf32>
      %c0_22 = arith.constant 0 : index
      %c0_23 = arith.constant 0 : index
      %24 = vector.load %arg7[%c0_22, %c0_23] : memref<16x128xf32, #tpu.memory_space<vmem>>, vector<16x128xf32>
      %25 = arith.mulf %23, %24 : vector<16x128xf32>
      %26 = arith.addf %19, %25 : vector<16x128xf32>
      %c0_24 = arith.constant 0 : index
      %c0_25 = arith.constant 0 : index
      %27 = vector.load %arg8[%c0_24, %c0_25] : memref<16x128xf32, #tpu.memory_space<vmem>>, vector<16x128xf32>
      tpu.vector_store %arg8[%c0_24, %c0_25], %26 {strides = array<i32>} : memref<16x128xf32, #tpu.memory_space<vmem>>, vector<16x128xf32>,
    } else {
    }
    return
  }
  func.func @transform_0(%arg0: i32, %arg1: i32, %arg2: i32) -> (i32, i32) {
    %c0_i32 = arith.constant 0 : i32
    return %arg0, %arg2 : i32, i32
  }
  func.func @transform_1(%arg0: i32, %arg1: i32, %arg2: i32) -> (i32, i32) {
    %c0_i32 = arith.constant 0 : i32
    return %arg1, %arg2 : i32, i32
  }
  func.func @transform_2(%arg0: i32, %arg1: i32, %arg2: i32) -> (i32, i32) {
    %c0_i32 = arith.constant 0 : i32
    return %arg1, %arg2 : i32, i32
  }
  func.func @transform_3(%arg0: i32, %arg1: i32, %arg2: i32) -> (i32, i32) {
    %c0_i32 = arith.constant 0 : i32
    %c0_i32_0 = arith.constant 0 : i32
    return %c0_i32, %arg1 : i32, i32
  }
  func.func @transform_4(%arg0: i32, %arg1: i32, %arg2: i32) -> (i32, i32) {
    %c0_i32 = arith.constant 0 : i32
    return %arg0, %arg1 : i32, i32
  }
  func.func @transform_5(%arg0: i32, %arg1: i32, %arg2: i32) -> (i32, i32) {
    %c0_i32 = arith.constant 0 : i32
    return %arg0, %arg1 : i32, i32
  }
}

</mosaic_0001>

<llo_original>
// kernel: tpu_custom_call.1
$region0: #{tpu_custom_call.1}
  #allocation0 [shape = 'u32[]', space=smem, size = 0x4, offset = 0x4, fixed_abs, tag = 'smem constant byte address 0x4 - core index']
  #allocation1 [shape = 'u32[144,128]{1,0:T(1,128)}', space=vmem, size = 0x12000, scoped, tag = 'internal scratch']
  #allocation2 [shape = 'f32[16,128]{1,0:T(8,128)}', space=vmem, size = 0x2000, scoped, tag = 'scratch operand']
  #allocation3 [shape = 'f32[16,128]{1,0:T(8,128)}', space=vmem, size = 0x2000, scoped, tag = 'scratch operand']
  %s0 = inlined_call_operand.hbm [shape: f32[16,128], index: 0, kind: input, shape index: {}]
  %s1 = inlined_call_operand.hbm [shape: f32[128,128], index: 1, kind: input, shape index: {}]
  %s2 = inlined_call_operand.hbm [shape: f32[128,128], index: 2, kind: input, shape index: {}]
  %s3 = inlined_call_operand.vmem [shape: f32[1,128], index: 3, kind: input, shape index: {}]
  %s4 = inlined_call_operand.hbm [shape: f32[16,128], index: 4, kind: input, shape index: {}]
  %s5 = inlined_call_operand.hbm [shape: f32[16,128], index: 5, kind: output, shape index: {}]
  %s6 = sld [smem:[#allocation0]]
  $region54: #{tpu_custom_call.1} parent=0
    _
  %s8 = ssub.s32 1, %s6
  %s9 = scalar_select 0, %s8, %s6
  $region1: #{tpu_custom_call.1} parent=0
    #allocation4 [shape = 'u8[8192]{0}', space=vmem, size = 0x2000, scoped, tag = 'input window, operand 0, single buffered']
    #allocation5 [shape = 's32[1]{0}', space=sflag, size = 0x4, scoped, tag = 'scoped memory for tpu_custom_call.1']
    #allocation6 [shape = 's32[1]{0}', space=sflag, size = 0x4, scoped, tag = 'scoped memory for tpu_custom_call.1']
    #allocation7 [shape = 'u8[65536]{0}', space=vmem, size = 0x10000, scoped, tag = 'input window, operand 1, single buffered']
    #allocation8 [shape = 's32[1]{0}', space=sflag, size = 0x4, scoped, tag = 'scoped memory for tpu_custom_call.1']
    #allocation9 [shape = 'u8[65536]{0}', space=vmem, size = 0x10000, scoped, tag = 'input window, operand 2, single buffered']
    #allocation10 [shape = 'u8[8192]{0}', space=vmem, size = 0x2000, scoped, tag = 'input window, operand 4, single buffered']
    #allocation11 [shape = 's32[1]{0}', space=sflag, size = 0x4, scoped, tag = 'scoped memory for tpu_custom_call.1']
    #allocation12 [shape = 'u8[8192]{0}', space=vmem, size = 0x2000, scoped, tag = 'output window, operand 0, single buffered']
    %10 = vsyncpa [#allocation5], 0
    %11 = vsyncpa [#allocation8], 0
    %12 = vsyncpa [#allocation11], 0
    %13 = vsyncpa [#allocation6], 0
    // Predicated region
    $region2: #{tpu_custom_call.1} parent=1 // pred_check
      _
    $region3: #{tpu_custom_call.1} parent=1 // pred_check_branch
      %15 = sbr.rel (0) target = $region5
    $region4: #{tpu_custom_call.1} parent=1 // pred_region
      %s17 = ssub.s32 256, 256
      %18 = vsyncadd [#allocation5], %s17
      %s19 = sshll.u32 [#allocation4], 4
      %s20 = int_to_ptr.vmem [resolvable:$true] %s19
      %25 = dma.hbm_to_vmem [thread:$0]  %s0, 256, %s20, [#allocation5], 128, 128, 8
    $region5: #{tpu_custom_call.1} parent=1 // pred_fallthru
      _
    // Predicated region
    $region6: #{tpu_custom_call.1} parent=1 // pred_check
      _
    $region7: #{tpu_custom_call.1} parent=1 // pred_check_branch
      %27 = sbr.rel (0) target = $region9
    $region8: #{tpu_custom_call.1} parent=1 // pred_region
      %s29 = ssub.s32 2048, 2048
      %30 = vsyncadd [#allocation8], %s29
      %s31 = sshll.u32 [#allocation7], 4
      %s32 = int_to_ptr.vmem [resolvable:$true] %s31
      %37 = dma.hbm_to_vmem [thread:$0]  %s1, 2048, %s32, [#allocation8], 128, 128, 8
    $region9: #{tpu_custom_call.1} parent=1 // pred_fallthru
      _
    // Predicated region
    $region10: #{tpu_custom_call.1} parent=1 // pred_check
      _
    $region11: #{tpu_custom_call.1} parent=1 // pred_check_branch
      %39 = sbr.rel (0) target = $region13
    $region12: #{tpu_custom_call.1} parent=1 // pred_region
      %s41 = ssub.s32 2048, 2048
      %42 = vsyncadd [#allocation8], %s41
      %s43 = sshll.u32 [#allocation9], 4
      %s44 = int_to_ptr.vmem [resolvable:$true] %s43
      %49 = dma.hbm_to_vmem [thread:$0]  %s2, 2048, %s44, [#allocation8], 128, 128, 8
    $region13: #{tpu_custom_call.1} parent=1 // pred_fallthru
      _
    // Predicated region
    $region14: #{tpu_custom_call.1} parent=1 // pred_check
      _
    $region15: #{tpu_custom_call.1} parent=1 // pred_check_branch
      %51 = sbr.rel (0) target = $region17
    $region16: #{tpu_custom_call.1} parent=1 // pred_region
      _
    $region17: #{tpu_custom_call.1} parent=1 // pred_fallthru
      _
    // Predicated region
    $region18: #{tpu_custom_call.1} parent=1 // pred_check
      _
    $region19: #{tpu_custom_call.1} parent=1 // pred_check_branch
      %53 = sbr.rel (0) target = $region21
    $region20: #{tpu_custom_call.1} parent=1 // pred_region
      %s55 = ssub.s32 256, 256
      %56 = vsyncadd [#allocation11], %s55
      %s57 = sshll.u32 [#allocation10], 4
      %s58 = int_to_ptr.vmem [resolvable:$true] %s57
      %63 = dma.hbm_to_vmem [thread:$0]  %s4, 256, %s58, [#allocation11], 128, 128, 8
    $region21: #{tpu_custom_call.1} parent=1 // pred_fallthru
      _
    // Predicated region
    $region22: #{tpu_custom_call.1} parent=1 // pred_check
      _
    $region23: #{tpu_custom_call.1} parent=1 // pred_check_branch
      %65 = sbr.rel (0) target = $region25
    $region24: #{tpu_custom_call.1} parent=1 // pred_region
      %66 = dma.done [#allocation5], 256
    $region25: #{tpu_custom_call.1} parent=1 // pred_fallthru
      _
    // Predicated region
    $region26: #{tpu_custom_call.1} parent=1 // pred_check
      _
    $region27: #{tpu_custom_call.1} parent=1 // pred_check_branch
      %68 = sbr.rel (0) target = $region29
    $region28: #{tpu_custom_call.1} parent=1 // pred_region
      %69 = dma.done [#allocation8], 2048
    $region29: #{tpu_custom_call.1} parent=1 // pred_fallthru
      _
    // Predicated region
    $region30: #{tpu_custom_call.1} parent=1 // pred_check
      _
    $region31: #{tpu_custom_call.1} parent=1 // pred_check_branch
      %71 = sbr.rel (0) target = $region33
    $region32: #{tpu_custom_call.1} parent=1 // pred_region
      %72 = dma.done [#allocation8], 2048
    $region33: #{tpu_custom_call.1} parent=1 // pred_fallthru
      _
    // Predicated region
    $region34: #{tpu_custom_call.1} parent=1 // pred_check
      _
    $region35: #{tpu_custom_call.1} parent=1 // pred_check_branch
      %74 = sbr.rel (0) target = $region37
    $region36: #{tpu_custom_call.1} parent=1 // pred_region
      %75 = dma.done [#allocation11], 256
    $region37: #{tpu_custom_call.1} parent=1 // pred_fallthru
      _
    %p76 = scmp.eq.s32.totalorder 0, 0
    // Predicated region
    $region38: #{tpu_custom_call.1} parent=1 // pred_check
      %p77 = pneg %p76
    $region39: #{tpu_custom_call.1} parent=1 // pred_check_branch
      %79 = sbr.rel (%p77) target = $region41
    $region40: #{tpu_custom_call.1} parent=1 // pred_region
      %v80 = vld [vmem:[%s3] sm:$0x1]
      %v82 = vlaneseq
      %v83 = vshrl.u32 %v82, 7
      %v84 = vsub.s32 0, %v83
      %v85 = vrot.slane %v80, %v84
      %v87 = vadd.f32 %v85, 0.0
      %88 = vst [vmem:[#allocation2] sm:$0xff] %v87
      %89 = vst [vmem:[#allocation2 + $0x8] sm:$0xff] %v87
      %90 = vst [vmem:[#allocation3] sm:$0xff] 0.0
      %91 = vst [vmem:[#allocation3 + $0x8] sm:$0xff] 0.0
    $region41: #{tpu_custom_call.1} parent=1 // pred_fallthru
      _
    %v92 = vld [vmem:[#allocation4] sm:$0xff]
    %v93 = vld [vmem:[#allocation4 + $0x8] sm:$0xff]
    %v94 = vld [vmem:[#allocation2] sm:$0xff]
    %v95 = vld [vmem:[#allocation2 + $0x8] sm:$0xff]
    %v96 = vld [vmem:[#allocation7] sm:$0xff]
    %v97 = vld [vmem:[#allocation7 + $0x8] sm:$0xff]
    %v98 = vld [vmem:[#allocation7 + $0x10] sm:$0xff]
    %v99 = vld [vmem:[#allocation7 + $0x18] sm:$0xff]
    %v100 = vld [vmem:[#allocation7 + $0x20] sm:$0xff]
    %v101 = vld [vmem:[#allocation7 + $0x28] sm:$0xff]
    %v102 = vld [vmem:[#allocation7 + $0x30] sm:$0xff]
    %v103 = vld [vmem:[#allocation7 + $0x38] sm:$0xff]
    %v104 = vld [vmem:[#allocation7 + $0x40] sm:$0xff]
    %v105 = vld [vmem:[#allocation7 + $0x48] sm:$0xff]
    %v106 = vld [vmem:[#allocation7 + $0x50] sm:$0xff]
    %v107 = vld [vmem:[#allocation7 + $0x58] sm:$0xff]
    %v108 = vld [vmem:[#allocation7 + $0x60] sm:$0xff]
    %v109 = vld [vmem:[#allocation7 + $0x68] sm:$0xff]
    %v110 = vld [vmem:[#allocation7 + $0x70] sm:$0xff]
    %v111 = vld [vmem:[#allocation7 + $0x78] sm:$0xff]
    %112 = vmatprep.subr.mxu0 0.0
    %113 = vmatpush1.xpose.msra.mxu0 %v96
    %114 = vmatprep.subr.mxu0 0.0
    %115 = vmatpush1.xpose.msra.mxu0 %v97
    %116 = vmatprep.subr.mxu0 0.0
    %117 = vmatpush1.xpose.msra.mxu0 %v98
    %118 = vmatprep.subr.mxu0 0.0
    %119 = vmatpush1.xpose.msra.mxu0 %v99
    %120 = vmatprep.subr.mxu0 0.0
    %121 = vmatpush1.xpose.msra.mxu0 %v100
    %122 = vmatprep.subr.mxu0 0.0
    %123 = vmatpush1.xpose.msra.mxu0 %v101
    %124 = vmatprep.subr.mxu0 0.0
    %125 = vmatpush1.xpose.msra.mxu0 %v102
    %126 = vmatprep.subr.mxu0 0.0
    %127 = vmatpush1.xpose.msra.mxu0 %v103
    %128 = vmatprep.subr.mxu0 0.0
    %129 = vmatpush1.xpose.msra.mxu0 %v104
    %130 = vmatprep.subr.mxu0 0.0
    %131 = vmatpush1.xpose.msra.mxu0 %v105
    %132 = vmatprep.subr.mxu0 0.0
    %133 = vmatpush1.xpose.msra.mxu0 %v106
    %134 = vmatprep.subr.mxu0 0.0
    %135 = vmatpush1.xpose.msra.mxu0 %v107
    %136 = vmatprep.subr.mxu0 0.0
    %137 = vmatpush1.xpose.msra.mxu0 %v108
    %138 = vmatprep.subr.mxu0 0.0
    %139 = vmatpush1.xpose.msra.mxu0 %v109
    %140 = vmatprep.subr.mxu0 0.0
    %141 = vmatpush1.xpose.msra.mxu0 %v110
    %142 = vmatprep.subr.mxu0 0.0
    %143 = vmatpush1.xpose.msra.mxu0 %v111
    %144 = vmatprep.subr.mxu0 0.0
    %145 = vmatpush1.xpose.msra.mxu0 0.0
    %146 = vmatprep.subr.mxu0 0.0
    %147 = vmatpush1.xpose.msra.mxu0 0.0
    %148 = vmatprep.subr.mxu0 0.0
    %149 = vmatpush1.xpose.msra.mxu0 0.0
    %150 = vmatprep.subr.mxu0 0.0
    %151 = vmatpush1.xpose.msra.mxu0 0.0
    %152 = vmatprep.subr.mxu0 0.0
    %153 = vmatpush1.xpose.msra.mxu0 0.0
    %154 = vmatprep.subr.mxu0 0.0
    %155 = vmatpush1.xpose.msra.mxu0 0.0
    %156 = vmatprep.subr.mxu0 0.0
    %157 = vmatpush1.xpose.msra.mxu0 0.0
    %158 = vmatprep.subr.mxu0 0.0
    %159 = vmatpush1.xpose.msra.mxu0 0.0
    %160 = vmatprep.subr.mxu0 0.0
    %161 = vmatpush1.xpose.msra.mxu0 0.0
    %162 = vmatprep.subr.mxu0 0.0
    %163 = vmatpush1.xpose.msra.mxu0 0.0
    %164 = vmatprep.subr.mxu0 0.0
    %165 = vmatpush1.xpose.msra.mxu0 0.0
    %166 = vmatprep.subr.mxu0 0.0
    %167 = vmatpush1.xpose.msra.mxu0 0.0
    %168 = vmatprep.subr.mxu0 0.0
    %169 = vmatpush1.xpose.msra.mxu0 0.0
    %170 = vmatprep.subr.mxu0 0.0
    %171 = vmatpush1.xpose.msra.mxu0 0.0
    %172 = vmatprep.subr.mxu0 0.0
    %173 = vmatpush1.xpose.msra.mxu0 0.0
    %174 = vmatprep.subr.mxu0 0.0
    %175 = vmatpush1.xpose.msra.mxu0 0.0
    %176 = vmatprep.mubr.f32.mxu0 0.0
    %177 = vmatmul.mubr.f32.gmra.mrb[0].mxu0 %v92
    %v178 = vpop.f32.mrb[0].mxu0
    %v179 = vadd.f32 0.0, %v178
    %v180 = vpop.f32.mrb[0].mxu0
    %181 = vmatprep.mubr.f32.mxu0 0.0
    %182 = vmatmul.mubr.f32.gmra.mrb[0].mxu0 %v93
    %v183 = vpop.f32.mrb[0].mxu0
    %v184 = vadd.f32 0.0, %v183
    %v185 = vpop.f32.mrb[0].mxu0
    %186 = vdwg.mxu0
    %v187 = vadd.f32 %v94, %v179
    %v188 = vadd.f32 %v95, %v184
    %189 = vst [vmem:[#allocation2] sm:$0xff] %v187
    %190 = vst [vmem:[#allocation2 + $0x8] sm:$0xff] %v188
    %v191 = vld [vmem:[#allocation9] sm:$0xff]
    %v192 = vld [vmem:[#allocation9 + $0x8] sm:$0xff]
    %v193 = vld [vmem:[#allocation9 + $0x10] sm:$0xff]
    %v194 = vld [vmem:[#allocation9 + $0x18] sm:$0xff]
    %v195 = vld [vmem:[#allocation9 + $0x20] sm:$0xff]
    %v196 = vld [vmem:[#allocation9 + $0x28] sm:$0xff]
    %v197 = vld [vmem:[#allocation9 + $0x30] sm:$0xff]
    %v198 = vld [vmem:[#allocation9 + $0x38] sm:$0xff]
    %v199 = vld [vmem:[#allocation9 + $0x40] sm:$0xff]
    %v200 = vld [vmem:[#allocation9 + $0x48] sm:$0xff]
    %v201 = vld [vmem:[#allocation9 + $0x50] sm:$0xff]
    %v202 = vld [vmem:[#allocation9 + $0x58] sm:$0xff]
    %v203 = vld [vmem:[#allocation9 + $0x60] sm:$0xff]
    %v204 = vld [vmem:[#allocation9 + $0x68] sm:$0xff]
    %v205 = vld [vmem:[#allocation9 + $0x70] sm:$0xff]
    %v206 = vld [vmem:[#allocation9 + $0x78] sm:$0xff]
    %v207 = vmul.f32 %v191, 1.442695
    %v208 = vpow.pop %v207
    %v209 = vmul.f32 %v192, 1.442695
    %v210 = vpow.pop %v209
    %v211 = vmul.f32 %v193, 1.442695
    %v212 = vpow.pop %v211
    %v213 = vmul.f32 %v194, 1.442695
    %v214 = vpow.pop %v213
    %v215 = vmul.f32 %v195, 1.442695
    %v216 = vpow.pop %v215
    %v217 = vmul.f32 %v196, 1.442695
    %v218 = vpow.pop %v217
    %v219 = vmul.f32 %v197, 1.442695
    %v220 = vpow.pop %v219
    %v221 = vmul.f32 %v198, 1.442695
    %v222 = vpow.pop %v221
    %v223 = vmul.f32 %v199, 1.442695
    %v224 = vpow.pop %v223
    %v225 = vmul.f32 %v200, 1.442695
    %v226 = vpow.pop %v225
    %v227 = vmul.f32 %v201, 1.442695
    %v228 = vpow.pop %v227
    %v229 = vmul.f32 %v202, 1.442695
    %v230 = vpow.pop %v229
    %v231 = vmul.f32 %v203, 1.442695
    %v232 = vpow.pop %v231
    %v233 = vmul.f32 %v204, 1.442695
    %v234 = vpow.pop %v233
    %v235 = vmul.f32 %v205, 1.442695
    %v236 = vpow.pop %v235
    %v237 = vmul.f32 %v206, 1.442695
    %v238 = vpow.pop %v237
    %v239 = vld [vmem:[#allocation3] sm:$0xff]
    %v240 = vld [vmem:[#allocation3 + $0x8] sm:$0xff]
    %v241 = vmul.f32 %v92, %v92
    %v242 = vmul.f32 %v93, %v93
    %243 = vmatprep.subr.mxu0 0.0
    %244 = vmatpush1.xpose.msra.mxu0 %v208
    %245 = vmatprep.subr.mxu0 0.0
    %246 = vmatpush1.xpose.msra.mxu0 %v210
    %247 = vmatprep.subr.mxu0 0.0
    %248 = vmatpush1.xpose.msra.mxu0 %v212
    %249 = vmatprep.subr.mxu0 0.0
    %250 = vmatpush1.xpose.msra.mxu0 %v214
    %251 = vmatprep.subr.mxu0 0.0
    %252 = vmatpush1.xpose.msra.mxu0 %v216
    %253 = vmatprep.subr.mxu0 0.0
    %254 = vmatpush1.xpose.msra.mxu0 %v218
    %255 = vmatprep.subr.mxu0 0.0
    %256 = vmatpush1.xpose.msra.mxu0 %v220
    %257 = vmatprep.subr.mxu0 0.0
    %258 = vmatpush1.xpose.msra.mxu0 %v222
    %259 = vmatprep.subr.mxu0 0.0
    %260 = vmatpush1.xpose.msra.mxu0 %v224
    %261 = vmatprep.subr.mxu0 0.0
    %262 = vmatpush1.xpose.msra.mxu0 %v226
    %263 = vmatprep.subr.mxu0 0.0
    %264 = vmatpush1.xpose.msra.mxu0 %v228
    %265 = vmatprep.subr.mxu0 0.0
    %266 = vmatpush1.xpose.msra.mxu0 %v230
    %267 = vmatprep.subr.mxu0 0.0
    %268 = vmatpush1.xpose.msra.mxu0 %v232
    %269 = vmatprep.subr.mxu0 0.0
    %270 = vmatpush1.xpose.msra.mxu0 %v234
    %271 = vmatprep.subr.mxu0 0.0
    %272 = vmatpush1.xpose.msra.mxu0 %v236
    %273 = vmatprep.subr.mxu0 0.0
    %274 = vmatpush1.xpose.msra.mxu0 %v238
    %275 = vmatprep.subr.mxu0 0.0
    %276 = vmatpush1.xpose.msra.mxu0 0.0
    %277 = vmatprep.subr.mxu0 0.0
    %278 = vmatpush1.xpose.msra.mxu0 0.0
    %279 = vmatprep.subr.mxu0 0.0
    %280 = vmatpush1.xpose.msra.mxu0 0.0
    %281 = vmatprep.subr.mxu0 0.0
    %282 = vmatpush1.xpose.msra.mxu0 0.0
    %283 = vmatprep.subr.mxu0 0.0
    %284 = vmatpush1.xpose.msra.mxu0 0.0
    %285 = vmatprep.subr.mxu0 0.0
    %286 = vmatpush1.xpose.msra.mxu0 0.0
    %287 = vmatprep.subr.mxu0 0.0
    %288 = vmatpush1.xpose.msra.mxu0 0.0
    %289 = vmatprep.subr.mxu0 0.0
    %290 = vmatpush1.xpose.msra.mxu0 0.0
    %291 = vmatprep.subr.mxu0 0.0
    %292 = vmatpush1.xpose.msra.mxu0 0.0
    %293 = vmatprep.subr.mxu0 0.0
    %294 = vmatpush1.xpose.msra.mxu0 0.0
    %295 = vmatprep.subr.mxu0 0.0
    %296 = vmatpush1.xpose.msra.mxu0 0.0
    %297 = vmatprep.subr.mxu0 0.0
    %298 = vmatpush1.xpose.msra.mxu0 0.0
    %299 = vmatprep.subr.mxu0 0.0
    %300 = vmatpush1.xpose.msra.mxu0 0.0
    %301 = vmatprep.subr.mxu0 0.0
    %302 = vmatpush1.xpose.msra.mxu0 0.0
    %303 = vmatprep.subr.mxu0 0.0
    %304 = vmatpush1.xpose.msra.mxu0 0.0
    %305 = vmatprep.subr.mxu0 0.0
    %306 = vmatpush1.xpose.msra.mxu0 0.0
    %307 = vmatprep.mubr.f32.mxu0 0.0
    %308 = vmatmul.mubr.f32.gmra.mrb[0].mxu0 %v241
    %v309 = vpop.f32.mrb[0].mxu0
    %v310 = vadd.f32 0.0, %v309
    %v311 = vpop.f32.mrb[0].mxu0
    %312 = vmatprep.mubr.f32.mxu0 0.0
    %313 = vmatmul.mubr.f32.gmra.mrb[0].mxu0 %v242
    %v314 = vpop.f32.mrb[0].mxu0
    %v315 = vadd.f32 0.0, %v314
    %v316 = vpop.f32.mrb[0].mxu0
    %317 = vdwg.mxu0
    %v318 = vadd.f32 %v239, %v310
    %v319 = vadd.f32 %v240, %v315
    %320 = vst [vmem:[#allocation3] sm:$0xff] %v318
    %321 = vst [vmem:[#allocation3 + $0x8] sm:$0xff] %v319
    // Predicated region
    $region42: #{tpu_custom_call.1} parent=1 // pred_check
      %p322 = pneg %p76
    $region43: #{tpu_custom_call.1} parent=1 // pred_check_branch
      %324 = sbr.rel (%p322) target = $region45
    $region44: #{tpu_custom_call.1} parent=1 // pred_region
      %v325 = vld [vmem:[#allocation2] sm:$0xff]
      %v326 = vld [vmem:[#allocation2 + $0x8] sm:$0xff]
      %v327 = vld [vmem:[#allocation3] sm:$0xff]
      %v328 = vld [vmem:[#allocation3 + $0x8] sm:$0xff]
      %v329 = vadd.f32 %v327, 1e-08
      %v330 = vadd.f32 %v328, 1e-08
      %v331 = vrsqrt.pop %v329
      %v332 = vmul.f32 %v329, %v331
      %vm333 = vcmp.eq.f32.partialorder %v329, inf
      %v334 = vsel %vm333, %v329, %v332
      %vm335 = vcmp.eq.f32.partialorder %v329, 0.0
      %v336 = vand.u32 %v329, 2147483648
      %v337 = vsel %vm335, %v336, %v334
      %v338 = vrsqrt.pop %v330
      %v339 = vmul.f32 %v330, %v338
      %vm340 = vcmp.eq.f32.partialorder %v330, inf
      %v341 = vsel %vm340, %v330, %v339
      %vm342 = vcmp.eq.f32.partialorder %v330, 0.0
      %v343 = vand.u32 %v330, 2147483648
      %v344 = vsel %vm342, %v343, %v341
      %v345 = vld [vmem:[#allocation10] sm:$0xff]
      %v346 = vld [vmem:[#allocation10 + $0x8] sm:$0xff]
      %v347 = vmul.f32 %v337, %v345
      %v348 = vmul.f32 %v344, %v346
      %v349 = vadd.f32 %v325, %v347
      %v350 = vadd.f32 %v326, %v348
      %351 = vst [vmem:[#allocation12] sm:$0xff] %v349
      %352 = vst [vmem:[#allocation12 + $0x8] sm:$0xff] %v350
    $region45: #{tpu_custom_call.1} parent=1 // pred_fallthru
      _
    // Predicated region
    $region46: #{tpu_custom_call.1} parent=1 // pred_check
      _
    $region47: #{tpu_custom_call.1} parent=1 // pred_check_branch
      %354 = sbr.rel (0) target = $region49
    $region48: #{tpu_custom_call.1} parent=1 // pred_region
      %s356 = ssub.s32 256, 256
      %357 = vsyncadd [#allocation6], %s356
      %s358 = sshll.u32 [#allocation12], 4
      %s359 = int_to_ptr.vmem [resolvable:$true] %s358
      %364 = dma.vmem_to_hbm [thread:$0]  %s359, 256, %s5, [#allocation6], 128, 128, 8
    $region49: #{tpu_custom_call.1} parent=1 // pred_fallthru
      _
    // Predicated region
    $region50: #{tpu_custom_call.1} parent=1 // pred_check
      _
    $region51: #{tpu_custom_call.1} parent=1 // pred_check_branch
      %366 = sbr.rel (0) target = $region53
    $region52: #{tpu_custom_call.1} parent=1 // pred_region
      %367 = dma.done [#allocation6], 256
    $region53: #{tpu_custom_call.1} parent=1 // pred_fallthru
      _
    %368 = vsyncpa [#allocation5], 1
    %369 = vsyncpa [#allocation8], 1
    %370 = vsyncpa [#allocation11], 1
    %371 = vsyncpa [#allocation6], 1

</llo_original>
